<compile_context>
chip_gen: v7x
topology: tpu7x:2x2x1
jax: 0.10.0
libtpu: 0.0.40
codegen_flags: <defaults>
</compile_context>

<pallas_src>
import jax
import jax.numpy as jnp
from jax.experimental import pallas as pl
from jax.experimental.pallas import tpu as pltpu


# ---------------- single-reduction-tile kernels (grid = (i, j)) -------------

def _linear_bias_single_kernel(x_ref, wt_ref, b_ref, o_ref):
    # x_ref: (tn, Cin_p)  wt_ref: (Cin_p, tcout)  b_ref: (1, tcout)
    o_ref[...] = (jnp.dot(x_ref[...], wt_ref[...],
                          preferred_element_type=jnp.float32)
                  + b_ref[...]).astype(o_ref.dtype)


def _linear_nobias_single_kernel(x_ref, wt_ref, o_ref):
    o_ref[...] = jnp.dot(x_ref[...], wt_ref[...],
                         preferred_element_type=jnp.float32).astype(o_ref.dtype)


# ---------------- multi-reduction-tile kernels (grid = (i, j, k)) -----------

def _linear_bias_multi_kernel(x_ref, wt_ref, b_ref, o_ref, acc_ref):
    k = pl.program_id(2)

    @pl.when(k == 0)
    def _():
        # Seed the accumulator with the bias: no separate add at the end.
        acc_ref[...] = jnp.broadcast_to(b_ref[...], acc_ref.shape)

    acc_ref[...] += jnp.dot(x_ref[...], wt_ref[...],
                            preferred_element_type=jnp.float32)

    @pl.when(k == pl.num_programs(2) - 1)
    def _():
        o_ref[...] = acc_ref[...].astype(o_ref.dtype)


def _linear_nobias_multi_kernel(x_ref, wt_ref, o_ref, acc_ref):
    k = pl.program_id(2)

    @pl.when(k == 0)
    def _():
        acc_ref[...] = jnp.zeros_like(acc_ref)

    acc_ref[...] += jnp.dot(x_ref[...], wt_ref[...],
                            preferred_element_type=jnp.float32)

    @pl.when(k == pl.num_programs(2) - 1)
    def _():
        o_ref[...] = acc_ref[...].astype(o_ref.dtype)


def _round_up(n, m):
    return ((n + m - 1) // m) * m


def minkowski_linear(features, weight, bias=None, *,
                     tile_n=256, tile_cout=256, tile_cin=512):
    """features: (N, Cin); weight: (Cout, Cin); bias: (Cout,) or None."""
    N, Cin = features.shape
    Cout = weight.shape[0]
    out_dtype = features.dtype

    # ---- lane/MXU-aligned padded sizes and tile sizes --------------------
    cin_p = _round_up(Cin, 128)           # lane-dense reduction dim
    tcin = min(tile_cin, cin_p)
    cin_p = _round_up(cin_p, tcin)

    cout_p = _round_up(Cout, 128)         # lane-dense output dim (full vst)
    tcout = min(tile_cout, cout_p)
    cout_p = _round_up(cout_p, tcout)

    tn = min(tile_n, _round_up(N, 8))     # sublane-aligned row tile
    n_p = _round_up(N, tn)

    # ---- pad operands (zeros contribute nothing to the matmul) ----------
    x_p = features
    if (n_p, cin_p) != (N, Cin):
        x_p = jnp.pad(features, ((0, n_p - N), (0, cin_p - Cin)))

    wt = weight.T  # (Cin, Cout) -- lane-dense RHS for the MXU
    if (cin_p, cout_p) != (Cin, Cout):
        wt = jnp.pad(wt, ((0, cin_p - Cin), (0, cout_p - Cout)))

    have_bias = bias is not None
    if have_bias:
        b_p = bias.astype(jnp.float32)
        if cout_p != Cout:
            b_p = jnp.pad(b_p, (0, cout_p - Cout))
        b_p = b_p.reshape(1, cout_p)

    out_shape = jax.ShapeDtypeStruct((n_p, cout_p), out_dtype)
    grid_k = cin_p // tcin

    if grid_k == 1:
        # Whole reduction fits one tile: 2-D grid, no accumulator scratch.
        grid = (n_p // tn, cout_p // tcout)
        x_spec = pl.BlockSpec((tn, cin_p), lambda i, j: (i, 0))
        w_spec = pl.BlockSpec((cin_p, tcout), lambda i, j: (0, j))
        o_spec = pl.BlockSpec((tn, tcout), lambda i, j: (i, j))
        cparams = pltpu.CompilerParams(
            dimension_semantics=("parallel", "parallel"))
        if have_bias:
            b_spec = pl.BlockSpec((1, tcout), lambda i, j: (0, j))
            out_p = pl.pallas_call(
                _linear_bias_single_kernel,
                out_shape=out_shape,
                grid_spec=pltpu.PrefetchScalarGridSpec(
                    num_scalar_prefetch=0, grid=grid,
                    in_specs=[x_spec, w_spec, b_spec],
                    out_specs=o_spec),
                compiler_params=cparams,
            )(x_p, wt, b_p)
        else:
            out_p = pl.pallas_call(
                _linear_nobias_single_kernel,
                out_shape=out_shape,
                grid_spec=pltpu.PrefetchScalarGridSpec(
                    num_scalar_prefetch=0, grid=grid,
                    in_specs=[x_spec, w_spec],
                    out_specs=o_spec),
                compiler_params=cparams,
            )(x_p, wt)
    else:
        # Wide Cin: 3-D grid with the reduction axis last + f32 accumulator.
        grid = (n_p // tn, cout_p // tcout, grid_k)
        x_spec = pl.BlockSpec((tn, tcin), lambda i, j, k: (i, k))
        w_spec = pl.BlockSpec((tcin, tcout), lambda i, j, k: (k, j))
        o_spec = pl.BlockSpec((tn, tcout), lambda i, j, k: (i, j))
        scratch = [pltpu.VMEM((tn, tcout), jnp.float32)]
        cparams = pltpu.CompilerParams(
            dimension_semantics=("parallel", "parallel", "arbitrary"))
        if have_bias:
            b_spec = pl.BlockSpec((1, tcout), lambda i, j, k: (0, j))
            out_p = pl.pallas_call(
                _linear_bias_multi_kernel,
                out_shape=out_shape,
                grid_spec=pltpu.PrefetchScalarGridSpec(
                    num_scalar_prefetch=0, grid=grid,
                    in_specs=[x_spec, w_spec, b_spec],
                    out_specs=o_spec,
                    scratch_shapes=scratch),
                compiler_params=cparams,
            )(x_p, wt, b_p)
        else:
            out_p = pl.pallas_call(
                _linear_nobias_multi_kernel,
                out_shape=out_shape,
                grid_spec=pltpu.PrefetchScalarGridSpec(
                    num_scalar_prefetch=0, grid=grid,
                    in_specs=[x_spec, w_spec],
                    out_specs=o_spec,
                    scratch_shapes=scratch),
                compiler_params=cparams,
            )(x_p, wt)

    # Slice the padding off (rows beyond N, channels beyond Cout).
    return out_p[:N, :Cout]


class MinkowskiLinearJAX:
    """Deterministic-parameter mirror of MinkowskiEngine's MinkowskiLinear."""

    def __init__(self, in_features, out_features, bias=True, key=None):
        if key is None:
            key = jax.random.PRNGKey(42)
        kw, kb = jax.random.split(key)
        # torch.nn.Linear default init: U(-1/sqrt(in), 1/sqrt(in))
        bound = 1.0 / (in_features ** 0.5)
        self.weight = jax.random.uniform(
            kw, (out_features, in_features), jnp.float32, -bound, bound)
        self.bias = (
            jax.random.uniform(kb, (out_features,), jnp.float32, -bound, bound)
            if bias else None)

    def __call__(self, features):
        # `features` plays the role of input.F; coords pass through unchanged.
        return minkowski_linear(features, self.weight, self.bias)


if __name__ == "__main__":
    key = jax.random.PRNGKey(0)
    kf, kp, kf2, kp2 = jax.random.split(key, 4)

    # Synthetic sparse tensor: N=64 active points, 32 input channels -> 16 out.
    # N / Cin / Cout intentionally not 128-multiples to exercise padding, and
    # this case exercises the single-reduction-tile (no-scratch) kernel path.
    N, in_features, out_features = 64, 32, 16
    feats = jax.random.normal(kf, (N, in_features), dtype=jnp.float32)

    layer = MinkowskiLinearJAX(in_features, out_features, bias=True, key=kp)
    out = jax.block_until_ready(layer(feats))
    ref = (jnp.dot(feats, layer.weight.T, precision=jax.lax.Precision.HIGHEST)
           + layer.bias)
    assert out.shape == (N, out_features)
    assert jnp.allclose(out, ref, atol=1e-5, rtol=1e-5)

    # No-bias kernel path.
    layer_nb = MinkowskiLinearJAX(in_features, out_features, bias=False, key=kp)
    out_nb = jax.block_until_ready(layer_nb(feats))
    ref_nb = jnp.dot(feats, layer_nb.weight.T,
                     precision=jax.lax.Precision.HIGHEST)
    assert jnp.allclose(out_nb, ref_nb, atol=1e-5, rtol=1e-5)

    # Wider layer (Cin=640 > tile_cin after padding -> multi-K accumulator
    # kernel path with the 3-D grid), still modest in size.
    N2, cin2, cout2 = 200, 640, 192
    feats2 = jax.random.normal(kf2, (N2, cin2), dtype=jnp.float32)
    layer2 = MinkowskiLinearJAX(cin2, cout2, bias=True, key=kp2)
    out2 = jax.block_until_ready(layer2(feats2))
    ref2 = (jnp.dot(feats2, layer2.weight.T,
                    precision=jax.lax.Precision.HIGHEST) + layer2.bias)
    assert out2.shape == (N2, cout2)
    assert jnp.allclose(out2, ref2, atol=1e-3, rtol=1e-3)

    # TODO(synk): SparseTensor coords_key / coords_manager bookkeeping has no
    # compute and is not represented here; only the feature transform is done.
    print("KERNEL_OK")
</pallas_src>

<mosaic_0001>
module attributes {stable_mosaic.version = 11 : i64} {
  func.func @_linear_bias_single_kernel(%arg0: i32, %arg1: i32, %arg2: memref<64x128xf32, #tpu.memory_space<vmem>>, %arg3: memref<128x128xf32, #tpu.memory_space<vmem>>, %arg4: memref<1x128xf32, #tpu.memory_space<vmem>>, %arg5: memref<64x128xf32, #tpu.memory_space<vmem>>) attributes {dimension_semantics = [#tpu.dimension_semantics<parallel>, #tpu.dimension_semantics<parallel>], iteration_bounds = array<i64: 1, 1>, scalar_prefetch = 0 : i64, scratch_operands = 0 : i64, tpu.core_type = #tpu.core_type<tc>, window_params = [{transform_indices = @transform_0, window_bounds = array<i64: 64, 128>}, {transform_indices = @transform_1, window_bounds = array<i64: 128, 128>}, {transform_indices = @transform_2, window_bounds = array<i64: 1, 128>}, {transform_indices = @transform_3, window_bounds = array<i64: 64, 128>}]} {
    %c0 = arith.constant 0 : index
    %c0_0 = arith.constant 0 : index
    %0 = vector.load %arg2[%c0, %c0_0] : memref<64x128xf32, #tpu.memory_space<vmem>>, vector<64x128xf32>
    %c0_1 = arith.constant 0 : index
    %c0_2 = arith.constant 0 : index
    %1 = vector.load %arg3[%c0_1, %c0_2] : memref<128x128xf32, #tpu.memory_space<vmem>>, vector<128x128xf32>
    %cst = arith.constant dense<0.000000e+00> : vector<64x128xf32>
    %2 = tpu.matmul %0, %1, %cst {dimension_numbers = #tpu.dot_dimension_numbers<[1], [0], [0], [1], [0, 0, 1, 1], [], []>} : vector<64x128xf32>, vector<128x128xf32>, vector<64x128xf32> -> vector<64x128xf32>
    %c0_3 = arith.constant 0 : index
    %c0_4 = arith.constant 0 : index
    %3 = vector.load %arg4[%c0_3, %c0_4] : memref<1x128xf32, #tpu.memory_space<vmem>>, vector<1x128xf32>
    %4 = vector.broadcast %3 : vector<1x128xf32> to vector<64x128xf32>
    %5 = arith.addf %2, %4 : vector<64x128xf32>
    %c0_5 = arith.constant 0 : index
    %c0_6 = arith.constant 0 : index
    %6 = vector.load %arg5[%c0_5, %c0_6] : memref<64x128xf32, #tpu.memory_space<vmem>>, vector<64x128xf32>
    tpu.vector_store %arg5[%c0_5, %c0_6], %5 {strides = array<i32>} : memref<64x128xf32, #tpu.memory_space<vmem>>, vector<64x128xf32>,
    return
  }
  func.func @transform_0(%arg0: i32, %arg1: i32) -> (i32, i32) {
    %c0_i32 = arith.constant 0 : i32
    %c0_i32_0 = arith.constant 0 : i32
    return %arg0, %c0_i32 : i32, i32
  }
  func.func @transform_1(%arg0: i32, %arg1: i32) -> (i32, i32) {
    %c0_i32 = arith.constant 0 : i32
    %c0_i32_0 = arith.constant 0 : i32
    return %c0_i32, %arg1 : i32, i32
  }
  func.func @transform_2(%arg0: i32, %arg1: i32) -> (i32, i32) {
    %c0_i32 = arith.constant 0 : i32
    %c0_i32_0 = arith.constant 0 : i32
    return %c0_i32, %arg1 : i32, i32
  }
  func.func @transform_3(%arg0: i32, %arg1: i32) -> (i32, i32) {
    %c0_i32 = arith.constant 0 : i32
    return %arg0, %arg1 : i32, i32
  }
}

</mosaic_0001>

<llo_original>
// kernel: tpu_custom_call.1
$region0: #{tpu_custom_call.1}
  #allocation0 [shape = 'u32[]', space=smem, size = 0x4, offset = 0x4, fixed_abs, tag = 'smem constant byte address 0x4 - core index']
  #allocation1 [shape = 'u32[144,128]{1,0:T(1,128)}', space=vmem, size = 0x12000, scoped, tag = 'internal scratch']
  %s0 = inlined_call_operand.hbm [shape: f32[64,128], index: 0, kind: input, shape index: {}]
  %s1 = inlined_call_operand.hbm [shape: f32[128,128], index: 1, kind: input, shape index: {}]
  %s2 = inlined_call_operand.vmem [shape: f32[1,128], index: 2, kind: input, shape index: {}]
  %s3 = inlined_call_operand.hbm [shape: f32[64,128], index: 3, kind: output, shape index: {}]
  %s4 = sld [smem:[#allocation0]]
  $region30: #{tpu_custom_call.1} parent=0
    _
  %s6 = ssub.s32 1, %s4
  %s7 = scalar_select 0, %s6, %s4
  $region1: #{tpu_custom_call.1} parent=0
    #allocation2 [shape = 'u8[32768]{0}', space=vmem, size = 0x8000, scoped, tag = 'input window, operand 0, single buffered']
    #allocation3 [shape = 's32[1]{0}', space=sflag, size = 0x4, scoped, tag = 'scoped memory for tpu_custom_call.1']
    #allocation4 [shape = 's32[1]{0}', space=sflag, size = 0x4, scoped, tag = 'scoped memory for tpu_custom_call.1']
    #allocation5 [shape = 'u8[65536]{0}', space=vmem, size = 0x10000, scoped, tag = 'input window, operand 1, single buffered']
    #allocation6 [shape = 's32[1]{0}', space=sflag, size = 0x4, scoped, tag = 'scoped memory for tpu_custom_call.1']
    #allocation7 [shape = 'u8[32768]{0}', space=vmem, size = 0x8000, scoped, tag = 'output window, operand 0, single buffered']
    %8 = vsyncpa [#allocation3], 0
    %9 = vsyncpa [#allocation6], 0
    %10 = vsyncpa [#allocation4], 0
    // Predicated region
    $region2: #{tpu_custom_call.1} parent=1 // pred_check
      _
    $region3: #{tpu_custom_call.1} parent=1 // pred_check_branch
      %12 = sbr.rel (0) target = $region5
    $region4: #{tpu_custom_call.1} parent=1 // pred_region
      %s14 = ssub.s32 1024, 1024
      %15 = vsyncadd [#allocation3], %s14
      %s16 = sshll.u32 [#allocation2], 4
      %s17 = int_to_ptr.vmem [resolvable:$true] %s16
      %22 = dma.hbm_to_vmem [thread:$0]  %s0, 1024, %s17, [#allocation3], 128, 128, 8
    $region5: #{tpu_custom_call.1} parent=1 // pred_fallthru
      _
    // Predicated region
    $region6: #{tpu_custom_call.1} parent=1 // pred_check
      _
    $region7: #{tpu_custom_call.1} parent=1 // pred_check_branch
      %24 = sbr.rel (0) target = $region9
    $region8: #{tpu_custom_call.1} parent=1 // pred_region
      %s26 = ssub.s32 2048, 2048
      %27 = vsyncadd [#allocation6], %s26
      %s28 = sshll.u32 [#allocation5], 4
      %s29 = int_to_ptr.vmem [resolvable:$true] %s28
      %34 = dma.hbm_to_vmem [thread:$0]  %s1, 2048, %s29, [#allocation6], 128, 128, 8
    $region9: #{tpu_custom_call.1} parent=1 // pred_fallthru
      _
    // Predicated region
    $region10: #{tpu_custom_call.1} parent=1 // pred_check
      _
    $region11: #{tpu_custom_call.1} parent=1 // pred_check_branch
      %36 = sbr.rel (0) target = $region13
    $region12: #{tpu_custom_call.1} parent=1 // pred_region
      _
    $region13: #{tpu_custom_call.1} parent=1 // pred_fallthru
      _
    // Predicated region
    $region14: #{tpu_custom_call.1} parent=1 // pred_check
      _
    $region15: #{tpu_custom_call.1} parent=1 // pred_check_branch
      %38 = sbr.rel (0) target = $region17
    $region16: #{tpu_custom_call.1} parent=1 // pred_region
      %39 = dma.done [#allocation3], 1024
    $region17: #{tpu_custom_call.1} parent=1 // pred_fallthru
      _
    // Predicated region
    $region18: #{tpu_custom_call.1} parent=1 // pred_check
      _
    $region19: #{tpu_custom_call.1} parent=1 // pred_check_branch
      %41 = sbr.rel (0) target = $region21
    $region20: #{tpu_custom_call.1} parent=1 // pred_region
      %42 = dma.done [#allocation6], 2048
    $region21: #{tpu_custom_call.1} parent=1 // pred_fallthru
      _
    %v43 = vld [vmem:[#allocation2] sm:$0xff]
    %v44 = vld [vmem:[#allocation2 + $0x8] sm:$0xff]
    %v45 = vld [vmem:[#allocation2 + $0x10] sm:$0xff]
    %v46 = vld [vmem:[#allocation2 + $0x18] sm:$0xff]
    %v47 = vld [vmem:[#allocation2 + $0x20] sm:$0xff]
    %v48 = vld [vmem:[#allocation2 + $0x28] sm:$0xff]
    %v49 = vld [vmem:[#allocation2 + $0x30] sm:$0xff]
    %v50 = vld [vmem:[#allocation2 + $0x38] sm:$0xff]
    %v51 = vld [vmem:[#allocation5] sm:$0xff]
    %v52 = vld [vmem:[#allocation5 + $0x8] sm:$0xff]
    %v53 = vld [vmem:[#allocation5 + $0x10] sm:$0xff]
    %v54 = vld [vmem:[#allocation5 + $0x18] sm:$0xff]
    %v55 = vld [vmem:[#allocation5 + $0x20] sm:$0xff]
    %v56 = vld [vmem:[#allocation5 + $0x28] sm:$0xff]
    %v57 = vld [vmem:[#allocation5 + $0x30] sm:$0xff]
    %v58 = vld [vmem:[#allocation5 + $0x38] sm:$0xff]
    %v59 = vld [vmem:[#allocation5 + $0x40] sm:$0xff]
    %v60 = vld [vmem:[#allocation5 + $0x48] sm:$0xff]
    %v61 = vld [vmem:[#allocation5 + $0x50] sm:$0xff]
    %v62 = vld [vmem:[#allocation5 + $0x58] sm:$0xff]
    %v63 = vld [vmem:[#allocation5 + $0x60] sm:$0xff]
    %v64 = vld [vmem:[#allocation5 + $0x68] sm:$0xff]
    %v65 = vld [vmem:[#allocation5 + $0x70] sm:$0xff]
    %v66 = vld [vmem:[#allocation5 + $0x78] sm:$0xff]
    %v67 = vld [vmem:[%s2] sm:$0x1]
    %v69 = vlaneseq
    %v70 = vshrl.u32 %v69, 7
    %v71 = vsub.s32 0, %v70
    %v72 = vrot.slane %v67, %v71
    %74 = vmatprep.subr.mxu0 0.0
    %75 = vmatpush1.msra.mxu0 %v51
    %76 = vmatprep.subr.mxu0 0.0
    %77 = vmatpush1.msra.mxu0 %v52
    %78 = vmatprep.subr.mxu0 0.0
    %79 = vmatpush1.msra.mxu0 %v53
    %80 = vmatprep.subr.mxu0 0.0
    %81 = vmatpush1.msra.mxu0 %v54
    %82 = vmatprep.subr.mxu0 0.0
    %83 = vmatpush1.msra.mxu0 %v55
    %84 = vmatprep.subr.mxu0 0.0
    %85 = vmatpush1.msra.mxu0 %v56
    %86 = vmatprep.subr.mxu0 0.0
    %87 = vmatpush1.msra.mxu0 %v57
    %88 = vmatprep.subr.mxu0 0.0
    %89 = vmatpush1.msra.mxu0 %v58
    %90 = vmatprep.subr.mxu0 0.0
    %91 = vmatpush1.msra.mxu0 %v59
    %92 = vmatprep.subr.mxu0 0.0
    %93 = vmatpush1.msra.mxu0 %v60
    %94 = vmatprep.subr.mxu0 0.0
    %95 = vmatpush1.msra.mxu0 %v61
    %96 = vmatprep.subr.mxu0 0.0
    %97 = vmatpush1.msra.mxu0 %v62
    %98 = vmatprep.subr.mxu0 0.0
    %99 = vmatpush1.msra.mxu0 %v63
    %100 = vmatprep.subr.mxu0 0.0
    %101 = vmatpush1.msra.mxu0 %v64
    %102 = vmatprep.subr.mxu0 0.0
    %103 = vmatpush1.msra.mxu0 %v65
    %104 = vmatprep.subr.mxu0 0.0
    %105 = vmatpush1.msra.mxu0 %v66
    %106 = vmatprep.subr.mxu0 0.0
    %107 = vmatpush1.msra.mxu0 0.0
    %108 = vmatprep.subr.mxu0 0.0
    %109 = vmatpush1.msra.mxu0 0.0
    %110 = vmatprep.subr.mxu0 0.0
    %111 = vmatpush1.msra.mxu0 0.0
    %112 = vmatprep.subr.mxu0 0.0
    %113 = vmatpush1.msra.mxu0 0.0
    %114 = vmatprep.subr.mxu0 0.0
    %115 = vmatpush1.msra.mxu0 0.0
    %116 = vmatprep.subr.mxu0 0.0
    %117 = vmatpush1.msra.mxu0 0.0
    %118 = vmatprep.subr.mxu0 0.0
    %119 = vmatpush1.msra.mxu0 0.0
    %120 = vmatprep.subr.mxu0 0.0
    %121 = vmatpush1.msra.mxu0 0.0
    %122 = vmatprep.subr.mxu0 0.0
    %123 = vmatpush1.msra.mxu0 0.0
    %124 = vmatprep.subr.mxu0 0.0
    %125 = vmatpush1.msra.mxu0 0.0
    %126 = vmatprep.subr.mxu0 0.0
    %127 = vmatpush1.msra.mxu0 0.0
    %128 = vmatprep.subr.mxu0 0.0
    %129 = vmatpush1.msra.mxu0 0.0
    %130 = vmatprep.subr.mxu0 0.0
    %131 = vmatpush1.msra.mxu0 0.0
    %132 = vmatprep.subr.mxu0 0.0
    %133 = vmatpush1.msra.mxu0 0.0
    %134 = vmatprep.subr.mxu0 0.0
    %135 = vmatpush1.msra.mxu0 0.0
    %136 = vmatprep.subr.mxu0 0.0
    %137 = vmatpush1.msra.mxu0 0.0
    %138 = vmatprep.mubr.f32.mxu0 0.0
    %139 = vmatmul.mubr.f32.gmra.mrb[0].mxu0 %v43
    %v140 = vpop.f32.mrb[0].mxu0
    %v141 = vadd.f32 %v72, %v140
    %v142 = vpop.f32.mrb[0].mxu0
    %143 = vmatprep.mubr.f32.mxu0 0.0
    %144 = vmatmul.mubr.f32.gmra.mrb[0].mxu0 %v44
    %v145 = vpop.f32.mrb[0].mxu0
    %v146 = vadd.f32 %v72, %v145
    %v147 = vpop.f32.mrb[0].mxu0
    %148 = vmatprep.mubr.f32.mxu0 0.0
    %149 = vmatmul.mubr.f32.gmra.mrb[0].mxu0 %v45
    %v150 = vpop.f32.mrb[0].mxu0
    %v151 = vadd.f32 %v72, %v150
    %v152 = vpop.f32.mrb[0].mxu0
    %153 = vmatprep.mubr.f32.mxu0 0.0
    %154 = vmatmul.mubr.f32.gmra.mrb[0].mxu0 %v46
    %v155 = vpop.f32.mrb[0].mxu0
    %v156 = vadd.f32 %v72, %v155
    %v157 = vpop.f32.mrb[0].mxu0
    %158 = vmatprep.mubr.f32.mxu0 0.0
    %159 = vmatmul.mubr.f32.gmra.mrb[0].mxu0 %v47
    %v160 = vpop.f32.mrb[0].mxu0
    %v161 = vadd.f32 %v72, %v160
    %v162 = vpop.f32.mrb[0].mxu0
    %163 = vmatprep.mubr.f32.mxu0 0.0
    %164 = vmatmul.mubr.f32.gmra.mrb[0].mxu0 %v48
    %v165 = vpop.f32.mrb[0].mxu0
    %v166 = vadd.f32 %v72, %v165
    %v167 = vpop.f32.mrb[0].mxu0
    %168 = vmatprep.mubr.f32.mxu0 0.0
    %169 = vmatmul.mubr.f32.gmra.mrb[0].mxu0 %v49
    %v170 = vpop.f32.mrb[0].mxu0
    %v171 = vadd.f32 %v72, %v170
    %v172 = vpop.f32.mrb[0].mxu0
    %173 = vmatprep.mubr.f32.mxu0 0.0
    %174 = vmatmul.mubr.f32.gmra.mrb[0].mxu0 %v50
    %v175 = vpop.f32.mrb[0].mxu0
    %v176 = vadd.f32 %v72, %v175
    %v177 = vpop.f32.mrb[0].mxu0
    %178 = vdwg.mxu0
    %179 = vst [vmem:[#allocation7] sm:$0xff] %v141
    %180 = vst [vmem:[#allocation7 + $0x8] sm:$0xff] %v146
    %181 = vst [vmem:[#allocation7 + $0x10] sm:$0xff] %v151
    %182 = vst [vmem:[#allocation7 + $0x18] sm:$0xff] %v156
    %183 = vst [vmem:[#allocation7 + $0x20] sm:$0xff] %v161
    %184 = vst [vmem:[#allocation7 + $0x28] sm:$0xff] %v166
    %185 = vst [vmem:[#allocation7 + $0x30] sm:$0xff] %v171
    %186 = vst [vmem:[#allocation7 + $0x38] sm:$0xff] %v176
    // Predicated region
    $region22: #{tpu_custom_call.1} parent=1 // pred_check
      _
    $region23: #{tpu_custom_call.1} parent=1 // pred_check_branch
      %188 = sbr.rel (0) target = $region25
    $region24: #{tpu_custom_call.1} parent=1 // pred_region
      %s190 = ssub.s32 1024, 1024
      %191 = vsyncadd [#allocation4], %s190
      %s192 = sshll.u32 [#allocation7], 4
      %s193 = int_to_ptr.vmem [resolvable:$true] %s192
      %198 = dma.vmem_to_hbm [thread:$0]  %s193, 1024, %s3, [#allocation4], 128, 128, 8
    $region25: #{tpu_custom_call.1} parent=1 // pred_fallthru
      _
    // Predicated region
    $region26: #{tpu_custom_call.1} parent=1 // pred_check
      _
    $region27: #{tpu_custom_call.1} parent=1 // pred_check_branch
      %200 = sbr.rel (0) target = $region29
    $region28: #{tpu_custom_call.1} parent=1 // pred_region
      %201 = dma.done [#allocation4], 1024
    $region29: #{tpu_custom_call.1} parent=1 // pred_fallthru
      _
    %202 = vsyncpa [#allocation3], 1
    %203 = vsyncpa [#allocation6], 1
    %204 = vsyncpa [#allocation4], 1

</llo_original>
